<compile_context>
chip_gen: v6e
topology: v6e:2x2x1
jax: 0.10.0
libtpu: 0.0.40
codegen_flags: <defaults>
</compile_context>

<pallas_src>
import functools

import jax
import jax.numpy as jnp
from jax import lax
from jax.experimental import pallas as pl
from jax.experimental.pallas import tpu as pltpu


def _mlp_clip_kernel(scal_ref,              # SMEM (3,): lo, hi, b3
                     x_ref,                 # VMEM [2, TILE]   (batch on lanes)
                     w1_ref, b1_ref,        # VMEM [16, 2], [16, 1]
                     w2_ref, b2_ref,        # VMEM [16, 16], [16, 1]
                     w3_ref,                # VMEM [16, 1]
                     o_ref,                 # VMEM [1, TILE]
                     *, chunk):
    tile = x_ref.shape[-1]
    num_chunks = tile // chunk

    # Resident (tiny) weights -> values once per grid step.
    w2 = w2_ref[...]                                           # [16, 16] (MXU LHS)
    lo = scal_ref[0]
    hi = scal_ref[1]
    b3 = scal_ref[2]

    # Hoisted loop-invariant lane-broadcasts (computed once per grid step).
    w1 = w1_ref[...]
    w1a = jnp.broadcast_to(w1[:, 0:1], (16, chunk))
    w1b = jnp.broadcast_to(w1[:, 1:2], (16, chunk))
    b1b = jnp.broadcast_to(b1_ref[...], (16, chunk))
    b2b = jnp.broadcast_to(b2_ref[...], (16, chunk))
    w3b = jnp.broadcast_to(w3_ref[...], (16, chunk))

    def body(c, carry):
        start = pl.multiple_of(c * chunk, chunk)
        x = x_ref[:, pl.ds(start, chunk)]                      # [2, chunk]

        # layer 1 (2 -> 16): two cheap VPU broadcast-FMAs.
        h1 = jnp.maximum(w1a * x[0:1, :] + w1b * x[1:2, :] + b1b, 0.0)

        # layer 2 (16 -> 16): MXU matmul, f32 accumulate (VALU stays free).
        h2 = jnp.maximum(
            jnp.dot(w2, h1, preferred_element_type=jnp.float32) + b2b, 0.0)

        # layer 3 (16 -> 1): elementwise scale + sublane reduce (XLU) + bias.
        out = jnp.sum(w3b * h2, axis=0, keepdims=True) + b3    # [1, chunk]

        o_ref[:, pl.ds(start, chunk)] = jnp.clip(out, lo, hi)
        return carry

    # Modest unroll (divides trip count) keeps live ranges bounded while giving
    # the LLO scheduler cross-iteration visibility.
    unroll = 4 if num_chunks % 4 == 0 else (2 if num_chunks % 2 == 0 else 1)
    lax.fori_loop(0, num_chunks, body, 0, unroll=unroll)


def constr_policy_loc_forward(x, params, input_bounds, *, max_tile=16384, chunk=512):
    """x: [N, 2] float32; params: torch-layout weights; input_bounds: [1, 2]."""
    n = x.shape[0]
    assert x.shape[1] == 2
    if n == 0:
        return jnp.zeros((0, 1), jnp.float32)

    # Pad the batch (lane axis) to a whole number of 512-lane chunks, then pick
    # a lane tile that (a) is a multiple of the chunk, (b) amortizes per-step
    # pipeline overhead, and (c) keeps >= 2 grid steps when there is enough
    # data so v7x can shard the "parallel" axis across both TensorCores.
    n_c = pl.cdiv(n, chunk) * chunk
    if n_c >= 2 * chunk:
        tile = min(max_tile, pl.cdiv(n_c, 2 * chunk) * chunk)
    else:
        tile = n_c
    n_pad = pl.cdiv(n_c, tile) * tile

    # Wrapper-side layout plumbing: feature-major / batch-on-lanes.
    # jnp.pad (single fused pad) instead of zero-fill + scatter.
    xt = jnp.pad(x.astype(jnp.float32).T, ((0, 0), (0, n_pad - n)))

    w1 = params["w1"].astype(jnp.float32)                      # [16, 2]
    b1 = params["b1"].astype(jnp.float32).reshape(16, 1)
    w2 = params["w2"].astype(jnp.float32)                      # [16, 16]
    b2 = params["b2"].astype(jnp.float32).reshape(16, 1)
    w3 = params["w3"].astype(jnp.float32).reshape(1, 16).T     # [16, 1]
    b3 = params["b3"].astype(jnp.float32).reshape(())

    scal = jnp.stack([input_bounds[0, 0].astype(jnp.float32),
                      input_bounds[0, 1].astype(jnp.float32),
                      b3])                                     # (3,) in SMEM

    resident = lambda a: pl.BlockSpec(a.shape, lambda i: (0,) * a.ndim)

    out_t = pl.pallas_call(
        functools.partial(_mlp_clip_kernel, chunk=chunk),
        out_shape=jax.ShapeDtypeStruct((1, n_pad), jnp.float32),
        grid=(n_pad // tile,),
        in_specs=[
            pl.BlockSpec(memory_space=pltpu.MemorySpace.SMEM),  # lo / hi / b3
            pl.BlockSpec((2, tile), lambda i: (0, i)),          # streamed x tile
            resident(w1), resident(b1),
            resident(w2), resident(b2),
            resident(w3),
        ],
        out_specs=pl.BlockSpec((1, tile), lambda i: (0, i)),    # lane-dense out
        compiler_params=pltpu.CompilerParams(
            dimension_semantics=("parallel",),                  # shard across TCs (v7x)
            vmem_limit_bytes=32 * 1024 * 1024,
        ),
    )(scal, xt, w1, b1, w2, b2, w3)

    return out_t[:, :n].T                                       # back to [N, 1]


def init_params(key):
    """Deterministic init with nn.Linear (torch) weight layout [out, in]."""
    ks = jax.random.split(key, 6)
    return {
        "w1": jax.random.normal(ks[0], (16, 2), jnp.float32) * 0.5,
        "b1": jax.random.normal(ks[1], (16,), jnp.float32) * 0.1,
        "w2": jax.random.normal(ks[2], (16, 16), jnp.float32) * 0.25,
        "b2": jax.random.normal(ks[3], (16,), jnp.float32) * 0.1,
        "w3": jax.random.normal(ks[4], (1, 16), jnp.float32) * 0.25,
        "b3": jax.random.normal(ks[5], (1,), jnp.float32) * 0.1,
    }


def reference_forward(x, params, input_bounds):
    h1 = jnp.maximum(x @ params["w1"].T + params["b1"], 0.0)
    h2 = jnp.maximum(h1 @ params["w2"].T + params["b2"], 0.0)
    out = h2 @ params["w3"].T + params["b3"]
    return jnp.clip(out, input_bounds[0, 0], input_bounds[0, 1])


if __name__ == "__main__":
    key = jax.random.PRNGKey(0)
    kx, kp = jax.random.split(key)

    params = init_params(kp)
    # input_bounds for the single output dim: [[min, max]]
    input_bounds = jnp.array([[-0.5, 0.5]], dtype=jnp.float32)

    # Small case (single tile, single chunk).
    N = 8
    x = jax.random.normal(kx, (N, 2), jnp.float32)
    out = jax.block_until_ready(constr_policy_loc_forward(x, params, input_bounds))
    ref = reference_forward(x, params, input_bounds)
    assert out.shape == (N, 1)
    assert jnp.allclose(out, ref, atol=1e-5, rtol=1e-5)

    # Mid case (2-step grid, multi-chunk fori_loop, padding/unpadding).
    N2 = 5000
    x2 = jax.random.normal(jax.random.PRNGKey(7), (N2, 2), jnp.float32)
    out2 = jax.block_until_ready(constr_policy_loc_forward(x2, params, input_bounds))
    ref2 = reference_forward(x2, params, input_bounds)
    assert out2.shape == (N2, 1)
    assert jnp.allclose(out2, ref2, atol=1e-5, rtol=1e-5)

    # Large case (max_tile reached, many grid steps, unrolled inner loop).
    N3 = 70000
    x3 = jax.random.normal(jax.random.PRNGKey(11), (N3, 2), jnp.float32)
    out3 = jax.block_until_ready(constr_policy_loc_forward(x3, params, input_bounds))
    ref3 = reference_forward(x3, params, input_bounds)
    assert out3.shape == (N3, 1)
    assert jnp.allclose(out3, ref3, atol=1e-5, rtol=1e-5)

    print("KERNEL_OK")
</pallas_src>

<mosaic_0001>
module attributes {stable_mosaic.version = 11 : i64} {
  func.func @_mlp_clip_kernel(%arg0: i32, %arg1: memref<3xf32, #tpu.memory_space<smem>>, %arg2: memref<2x512xf32, #tpu.memory_space<vmem>>, %arg3: memref<16x2xf32, #tpu.memory_space<vmem>>, %arg4: memref<16x1xf32, #tpu.memory_space<vmem>>, %arg5: memref<16x16xf32, #tpu.memory_space<vmem>>, %arg6: memref<16x1xf32, #tpu.memory_space<vmem>>, %arg7: memref<16x1xf32, #tpu.memory_space<vmem>>, %arg8: memref<1x512xf32, #tpu.memory_space<vmem>>) attributes {dimension_semantics = [#tpu.dimension_semantics<parallel>], iteration_bounds = array<i64: 1>, scalar_prefetch = 0 : i64, scratch_operands = 0 : i64, tpu.core_type = #tpu.core_type<tc>, window_params = [{transform_indices = @transform_0, window_bounds = array<i64: 3>}, {transform_indices = @transform_1, window_bounds = array<i64: 2, 512>}, {pipeline_mode = #tpu.pipeline_mode<synchronous>, transform_indices = @transform_2, window_bounds = array<i64: 16, 2>}, {pipeline_mode = #tpu.pipeline_mode<synchronous>, transform_indices = @transform_3, window_bounds = array<i64: 16, 1>}, {pipeline_mode = #tpu.pipeline_mode<synchronous>, transform_indices = @transform_4, window_bounds = array<i64: 16, 16>}, {pipeline_mode = #tpu.pipeline_mode<synchronous>, transform_indices = @transform_5, window_bounds = array<i64: 16, 1>}, {pipeline_mode = #tpu.pipeline_mode<synchronous>, transform_indices = @transform_6, window_bounds = array<i64: 16, 1>}, {transform_indices = @transform_7, window_bounds = array<i64: 1, 512>}]} {
    %c0 = arith.constant 0 : index
    %c0_0 = arith.constant 0 : index
    %0 = vector.load %arg5[%c0, %c0_0] : memref<16x16xf32, #tpu.memory_space<vmem>>, vector<16x16xf32>
    %c0_1 = arith.constant 0 : index
    %1 = memref.load %arg1[%c0_1] : memref<3xf32, #tpu.memory_space<smem>>
    %c1 = arith.constant 1 : index
    %2 = memref.load %arg1[%c1] : memref<3xf32, #tpu.memory_space<smem>>
    %c2 = arith.constant 2 : index
    %3 = memref.load %arg1[%c2] : memref<3xf32, #tpu.memory_space<smem>>
    %c0_2 = arith.constant 0 : index
    %c0_3 = arith.constant 0 : index
    %4 = vector.load %arg3[%c0_2, %c0_3] : memref<16x2xf32, #tpu.memory_space<vmem>>, vector<16x2xf32>
    %5 = vector.extract_strided_slice %4 {offsets = [0, 0], sizes = [16, 1], strides = [1, 1]} : vector<16x2xf32> to vector<16x1xf32>
    %6 = vector.shape_cast %5 : vector<16x1xf32> to vector<16x1xf32>
    %7 = vector.broadcast %6 : vector<16x1xf32> to vector<16x512xf32>
    %8 = vector.extract_strided_slice %4 {offsets = [0, 1], sizes = [16, 1], strides = [1, 1]} : vector<16x2xf32> to vector<16x1xf32>
    %9 = vector.shape_cast %8 : vector<16x1xf32> to vector<16x1xf32>
    %10 = vector.broadcast %9 : vector<16x1xf32> to vector<16x512xf32>
    %c0_4 = arith.constant 0 : index
    %c0_5 = arith.constant 0 : index
    %11 = vector.load %arg4[%c0_4, %c0_5] : memref<16x1xf32, #tpu.memory_space<vmem>>, vector<16x1xf32>
    %12 = vector.shape_cast %11 : vector<16x1xf32> to vector<16x1xf32>
    %13 = vector.broadcast %12 : vector<16x1xf32> to vector<16x512xf32>
    %c0_6 = arith.constant 0 : index
    %c0_7 = arith.constant 0 : index
    %14 = vector.load %arg6[%c0_6, %c0_7] : memref<16x1xf32, #tpu.memory_space<vmem>>, vector<16x1xf32>
    %15 = vector.shape_cast %14 : vector<16x1xf32> to vector<16x1xf32>
    %16 = vector.broadcast %15 : vector<16x1xf32> to vector<16x512xf32>
    %c0_8 = arith.constant 0 : index
    %c0_9 = arith.constant 0 : index
    %17 = vector.load %arg7[%c0_8, %c0_9] : memref<16x1xf32, #tpu.memory_space<vmem>>, vector<16x1xf32>
    %18 = vector.shape_cast %17 : vector<16x1xf32> to vector<16x1xf32>
    %19 = vector.broadcast %18 : vector<16x1xf32> to vector<16x512xf32>
    %c0_i32 = arith.constant 0 : i32
    %c512_i32 = arith.constant 512 : i32
    %20 = arith.muli %c0_i32, %c512_i32 : i32
    %21 = tpu.assume_multiple %20, 512 : i32
    %c0_10 = arith.constant 0 : index
    %22 = arith.index_cast %21 : i32 to index
    %23 = vector.load %arg2[%c0_10, %22] : memref<2x512xf32, #tpu.memory_space<vmem>>, vector<2x512xf32>
    %24 = vector.extract_strided_slice %23 {offsets = [0, 0], sizes = [1, 512], strides = [1, 1]} : vector<2x512xf32> to vector<1x512xf32>
    %25 = vector.broadcast %24 : vector<1x512xf32> to vector<16x512xf32>
    %26 = arith.mulf %7, %25 : vector<16x512xf32>
    %27 = vector.extract_strided_slice %23 {offsets = [1, 0], sizes = [1, 512], strides = [1, 1]} : vector<2x512xf32> to vector<1x512xf32>
    %28 = vector.broadcast %27 : vector<1x512xf32> to vector<16x512xf32>
    %29 = arith.mulf %10, %28 : vector<16x512xf32>
    %30 = arith.addf %26, %29 : vector<16x512xf32>
    %31 = arith.addf %30, %13 : vector<16x512xf32>
    %cst = arith.constant 0.000000e+00 : f32
    %32 = vector.broadcast %cst : f32 to vector<16x512xf32>
    %33 = arith.maximumf %31, %32 : vector<16x512xf32>
    %cst_11 = arith.constant dense<0.000000e+00> : vector<16x512xf32>
    %34 = tpu.matmul %0, %33, %cst_11 {dimension_numbers = #tpu.dot_dimension_numbers<[1], [0], [0], [1], [0, 0, 1, 1], [], []>} : vector<16x16xf32>, vector<16x512xf32>, vector<16x512xf32> -> vector<16x512xf32>
    %35 = arith.addf %34, %16 : vector<16x512xf32>
    %cst_12 = arith.constant 0.000000e+00 : f32
    %36 = vector.broadcast %cst_12 : f32 to vector<16x512xf32>
    %37 = arith.maximumf %35, %36 : vector<16x512xf32>
    %38 = arith.mulf %19, %37 : vector<16x512xf32>
    %cst_13 = arith.constant dense<0.000000e+00> : vector<512xf32>
    %39 = vector.multi_reduction <add>, %38, %cst_13 [0] : vector<16x512xf32> to vector<512xf32>
    %40 = vector.shape_cast %39 : vector<512xf32> to vector<1x512xf32>
    %41 = vector.broadcast %3 : f32 to vector<1x512xf32>
    %42 = arith.addf %40, %41 : vector<1x512xf32>
    %43 = vector.broadcast %1 : f32 to vector<1x512xf32>
    %44 = arith.maximumf %43, %42 : vector<1x512xf32>
    %45 = vector.broadcast %2 : f32 to vector<1x512xf32>
    %46 = arith.minimumf %45, %44 : vector<1x512xf32>
    %c0_14 = arith.constant 0 : index
    %47 = arith.index_cast %21 : i32 to index
    %48 = vector.load %arg8[%c0_14, %47] : memref<1x512xf32, #tpu.memory_space<vmem>>, vector<1x512xf32>
    tpu.vector_store %arg8[%c0_14, %47], %46 {strides = array<i32>} : memref<1x512xf32, #tpu.memory_space<vmem>>, vector<1x512xf32>,
    %c1_i32 = arith.constant 1 : i32
    return
  }
  func.func @transform_0(%arg0: i32) -> i32 {
    %c0_i32 = arith.constant 0 : i32
    %c0_i32_0 = arith.constant 0 : i32
    return %c0_i32 : i32
  }
  func.func @transform_1(%arg0: i32) -> (i32, i32) {
    %c0_i32 = arith.constant 0 : i32
    %c0_i32_0 = arith.constant 0 : i32
    return %c0_i32, %arg0 : i32, i32
  }
  func.func @transform_2(%arg0: i32) -> (i32, i32) {
    %c0_i32 = arith.constant 0 : i32
    %c0_i32_0 = arith.constant 0 : i32
    %c0_i32_1 = arith.constant 0 : i32
    return %c0_i32, %c0_i32_0 : i32, i32
  }
  func.func @transform_3(%arg0: i32) -> (i32, i32) {
    %c0_i32 = arith.constant 0 : i32
    %c0_i32_0 = arith.constant 0 : i32
    %c0_i32_1 = arith.constant 0 : i32
    return %c0_i32, %c0_i32_0 : i32, i32
  }
  func.func @transform_4(%arg0: i32) -> (i32, i32) {
    %c0_i32 = arith.constant 0 : i32
    %c0_i32_0 = arith.constant 0 : i32
    %c0_i32_1 = arith.constant 0 : i32
    return %c0_i32, %c0_i32_0 : i32, i32
  }
  func.func @transform_5(%arg0: i32) -> (i32, i32) {
    %c0_i32 = arith.constant 0 : i32
    %c0_i32_0 = arith.constant 0 : i32
    %c0_i32_1 = arith.constant 0 : i32
    return %c0_i32, %c0_i32_0 : i32, i32
  }
  func.func @transform_6(%arg0: i32) -> (i32, i32) {
    %c0_i32 = arith.constant 0 : i32
    %c0_i32_0 = arith.constant 0 : i32
    %c0_i32_1 = arith.constant 0 : i32
    return %c0_i32, %c0_i32_0 : i32, i32
  }
  func.func @transform_7(%arg0: i32) -> (i32, i32) {
    %c0_i32 = arith.constant 0 : i32
    %c0_i32_0 = arith.constant 0 : i32
    return %c0_i32, %arg0 : i32, i32
  }
}

</mosaic_0001>

<llo_original>
// kernel: tpu_custom_call.1
$region0: #{tpu_custom_call.1}
  #allocation0 [shape = 'u32[]', space=smem, size = 0x4, offset = 0x4, fixed_abs, tag = 'smem constant byte address 0x4 - core index']
  #allocation1 [shape = 'u32[144,128]{1,0:T(1,128)}', space=vmem, size = 0x12000, scoped, tag = 'internal scratch']
  %s0 = inlined_call_operand.vmem [shape: f32[3], index: 0, kind: input, shape index: {}]
  %s1 = inlined_call_operand.vmem [shape: f32[2,512], index: 1, kind: input, shape index: {}]
  %s2 = inlined_call_operand.vmem [shape: f32[16,2], index: 2, kind: input, shape index: {}]
  %s3 = inlined_call_operand.vmem [shape: f32[16,1], index: 3, kind: input, shape index: {}]
  %s4 = inlined_call_operand.vmem [shape: f32[16,16], index: 4, kind: input, shape index: {}]
  %s5 = inlined_call_operand.vmem [shape: f32[16,1], index: 5, kind: input, shape index: {}]
  %s6 = inlined_call_operand.vmem [shape: f32[16,1], index: 6, kind: input, shape index: {}]
  %s7 = inlined_call_operand.hbm [shape: f32[1,512], index: 7, kind: output, shape index: {}]
  %s8 = sld [smem:[#allocation0]]
  $region42: #{tpu_custom_call.1} parent=0
    _
  %s10 = ssub.s32 1, %s8
  %s11 = scalar_select 0, %s10, %s8
  $region1: #{tpu_custom_call.1} parent=0
    #allocation2 [shape = 'u8[512]{0}', space=smem, size = 0x200, scoped, tag = 'input window, operand 0, single buffered']
    #allocation3 [shape = 's32[1]{0}', space=sflag, size = 0x4, scoped, tag = 'scoped memory for tpu_custom_call.1']
    #allocation4 [shape = 's32[1]{0}', space=sflag, size = 0x4, scoped, tag = 'scoped memory for tpu_custom_call.1']
    #allocation5 [shape = 'u8[2048]{0}', space=vmem, size = 0x800, scoped, tag = 'output window, operand 0, single buffered']
    %12 = vsyncpa [#allocation4], 0
    %13 = vsyncpa [#allocation3], 0
    // Predicated region
    $region2: #{tpu_custom_call.1} parent=1 // pred_check
      _
    $region3: #{tpu_custom_call.1} parent=1 // pred_check_branch
      %15 = sbr.rel (0) target = $region5
    $region4: #{tpu_custom_call.1} parent=1 // pred_region
      %s17 = ssub.s32 16, 16
      %18 = vsyncadd [#allocation4], %s17
      %s20 = sshll.u32 %s0, 4
      %s21 = int_to_ptr.vmem [resolvable:$true] %s20
      %23 = dma.vmem_to_smem %s21, 16, [#allocation2], [#allocation4]
    $region5: #{tpu_custom_call.1} parent=1 // pred_fallthru
      _
    // Predicated region
    $region6: #{tpu_custom_call.1} parent=1 // pred_check
      _
    $region7: #{tpu_custom_call.1} parent=1 // pred_check_branch
      %25 = sbr.rel (0) target = $region9
    $region8: #{tpu_custom_call.1} parent=1 // pred_region
      _
    $region9: #{tpu_custom_call.1} parent=1 // pred_fallthru
      _
    // Predicated region
    $region10: #{tpu_custom_call.1} parent=1 // pred_check
      _
    $region11: #{tpu_custom_call.1} parent=1 // pred_check_branch
      %27 = sbr.rel (0) target = $region13
    $region12: #{tpu_custom_call.1} parent=1 // pred_region
      _
    $region13: #{tpu_custom_call.1} parent=1 // pred_fallthru
      _
    // Predicated region
    $region14: #{tpu_custom_call.1} parent=1 // pred_check
      _
    $region15: #{tpu_custom_call.1} parent=1 // pred_check_branch
      %29 = sbr.rel (0) target = $region17
    $region16: #{tpu_custom_call.1} parent=1 // pred_region
      _
    $region17: #{tpu_custom_call.1} parent=1 // pred_fallthru
      _
    // Predicated region
    $region18: #{tpu_custom_call.1} parent=1 // pred_check
      _
    $region19: #{tpu_custom_call.1} parent=1 // pred_check_branch
      %31 = sbr.rel (0) target = $region21
    $region20: #{tpu_custom_call.1} parent=1 // pred_region
      _
    $region21: #{tpu_custom_call.1} parent=1 // pred_fallthru
      _
    // Predicated region
    $region22: #{tpu_custom_call.1} parent=1 // pred_check
      _
    $region23: #{tpu_custom_call.1} parent=1 // pred_check_branch
      %33 = sbr.rel (0) target = $region25
    $region24: #{tpu_custom_call.1} parent=1 // pred_region
      _
    $region25: #{tpu_custom_call.1} parent=1 // pred_fallthru
      _
    // Predicated region
    $region26: #{tpu_custom_call.1} parent=1 // pred_check
      _
    $region27: #{tpu_custom_call.1} parent=1 // pred_check_branch
      %35 = sbr.rel (0) target = $region29
    $region28: #{tpu_custom_call.1} parent=1 // pred_region
      _
    $region29: #{tpu_custom_call.1} parent=1 // pred_fallthru
      _
    // Predicated region
    $region30: #{tpu_custom_call.1} parent=1 // pred_check
      _
    $region31: #{tpu_custom_call.1} parent=1 // pred_check_branch
      %37 = sbr.rel (0) target = $region33
    $region32: #{tpu_custom_call.1} parent=1 // pred_region
      %38 = dma.done [#allocation4], 16
    $region33: #{tpu_custom_call.1} parent=1 // pred_fallthru
      _
    %39 = sfence
    %v40 = vld [vmem:[%s4] sm:$0xff]
    %v41 = vld [vmem:[%s4 + $0x8] sm:$0xff]
    %s42 = sld [smem:[#allocation2]]
    %s43 = sld [smem:[#allocation2 + $0x1]]
    %s44 = sld [smem:[#allocation2 + $0x2]]
    %v45 = vld [vmem:[%s2] sm:$0xff]
    %v46 = vld [vmem:[%s2 + $0x8] sm:$0xff]
    %48 = vset.pattern.permute.xlu0 0
    %49 = vperm.xlu0 %48, %v45
    %v50 = vpop.permute.xlu0 %49
    %53 = vset.pattern.permute.xlu0 0
    %54 = vperm.xlu0 %53, %v46
    %v55 = vpop.permute.xlu0 %54
    %57 = vset.pattern.permute.xlu0 1
    %58 = vperm.xlu0 %57, %v45
    %v59 = vpop.permute.xlu0 %58
    %61 = vset.pattern.permute.xlu0 1
    %62 = vperm.xlu0 %61, %v46
    %v63 = vpop.permute.xlu0 %62
    %v65 = vld [vmem:[%s3] sm:$0xff]
    %v66 = vld [vmem:[%s3 + $0x8] sm:$0xff]
    %68 = vset.pattern.permute.xlu0 0
    %69 = vperm.xlu0 %68, %v65
    %v70 = vpop.permute.xlu0 %69
    %73 = vset.pattern.permute.xlu0 0
    %74 = vperm.xlu0 %73, %v66
    %v75 = vpop.permute.xlu0 %74
    %v77 = vld [vmem:[%s5] sm:$0xff]
    %v78 = vld [vmem:[%s5 + $0x8] sm:$0xff]
    %80 = vset.pattern.permute.xlu0 0
    %81 = vperm.xlu0 %80, %v77
    %v82 = vpop.permute.xlu0 %81
    %85 = vset.pattern.permute.xlu0 0
    %86 = vperm.xlu0 %85, %v78
    %v87 = vpop.permute.xlu0 %86
    %v89 = vld [vmem:[%s6] sm:$0xff]
    %v90 = vld [vmem:[%s6 + $0x8] sm:$0xff]
    %92 = vset.pattern.permute.xlu0 0
    %93 = vperm.xlu0 %92, %v89
    %v94 = vpop.permute.xlu0 %93
    %97 = vset.pattern.permute.xlu0 0
    %98 = vperm.xlu0 %97, %v90
    %v99 = vpop.permute.xlu0 %98
    %v101 = vld [vmem:[%s1] sm:$0xff]
    %v103 = vlaneseq
    %v104 = vshrl.u32 %v103, 7
    %v105 = vsub.s32 0, %v104
    %v106 = vrot.slane %v101, %v105
    %v107 = vlaneseq
    %v108 = vshrl.u32 %v107, 7
    %v109 = vsub.s32 2, %v108
    %v110 = vrot.slane %v101, %v109
    %v111 = vlaneseq
    %v112 = vshrl.u32 %v111, 7
    %v113 = vsub.s32 4, %v112
    %v114 = vrot.slane %v101, %v113
    %v115 = vlaneseq
    %v116 = vshrl.u32 %v115, 7
    %v117 = vsub.s32 6, %v116
    %v118 = vrot.slane %v101, %v117
    %v123 = vlaneseq
    %v124 = vshrl.u32 %v123, 7
    %v125 = vsub.s32 0, %v124
    %v126 = vrot.slane %v106, %v125
    %v127 = vlaneseq
    %v128 = vshrl.u32 %v127, 7
    %v129 = vsub.s32 0, %v128
    %v130 = vrot.slane %v110, %v129
    %v131 = vlaneseq
    %v132 = vshrl.u32 %v131, 7
    %v133 = vsub.s32 0, %v132
    %v134 = vrot.slane %v114, %v133
    %v135 = vlaneseq
    %v136 = vshrl.u32 %v135, 7
    %v137 = vsub.s32 0, %v136
    %v138 = vrot.slane %v118, %v137
    %v139 = vmul.f32 %v50, %v126
    %v140 = vmul.f32 %v50, %v130
    %v141 = vmul.f32 %v50, %v134
    %v142 = vmul.f32 %v50, %v138
    %v143 = vmul.f32 %v55, %v126
    %v144 = vmul.f32 %v55, %v130
    %v145 = vmul.f32 %v55, %v134
    %v146 = vmul.f32 %v55, %v138
    %v147 = vlaneseq
    %v148 = vshrl.u32 %v147, 7
    %v149 = vsub.s32 1, %v148
    %v150 = vrot.slane %v101, %v149
    %v151 = vlaneseq
    %v152 = vshrl.u32 %v151, 7
    %v153 = vsub.s32 3, %v152
    %v154 = vrot.slane %v101, %v153
    %v155 = vlaneseq
    %v156 = vshrl.u32 %v155, 7
    %v157 = vsub.s32 5, %v156
    %v158 = vrot.slane %v101, %v157
    %v159 = vlaneseq
    %v160 = vshrl.u32 %v159, 7
    %v161 = vsub.s32 7, %v160
    %v162 = vrot.slane %v101, %v161
    %v167 = vlaneseq
    %v168 = vshrl.u32 %v167, 7
    %v169 = vsub.s32 1, %v168
    %v170 = vrot.slane %v150, %v169
    %v171 = vlaneseq
    %v172 = vshrl.u32 %v171, 7
    %v173 = vsub.s32 1, %v172
    %v174 = vrot.slane %v154, %v173
    %v175 = vlaneseq
    %v176 = vshrl.u32 %v175, 7
    %v177 = vsub.s32 1, %v176
    %v178 = vrot.slane %v158, %v177
    %v179 = vlaneseq
    %v180 = vshrl.u32 %v179, 7
    %v181 = vsub.s32 1, %v180
    %v182 = vrot.slane %v162, %v181
    %v183 = vmul.f32 %v59, %v170
    %v184 = vmul.f32 %v59, %v174
    %v185 = vmul.f32 %v59, %v178
    %v186 = vmul.f32 %v59, %v182
    %v187 = vmul.f32 %v63, %v170
    %v188 = vmul.f32 %v63, %v174
    %v189 = vmul.f32 %v63, %v178
    %v190 = vmul.f32 %v63, %v182
    %v191 = vadd.f32 %v139, %v183
    %v192 = vadd.f32 %v140, %v184
    %v193 = vadd.f32 %v141, %v185
    %v194 = vadd.f32 %v142, %v186
    %v195 = vadd.f32 %v143, %v187
    %v196 = vadd.f32 %v144, %v188
    %v197 = vadd.f32 %v145, %v189
    %v198 = vadd.f32 %v146, %v190
    %v199 = vadd.f32 %v191, %v70
    %v200 = vadd.f32 %v192, %v70
    %v201 = vadd.f32 %v193, %v70
    %v202 = vadd.f32 %v194, %v70
    %v203 = vadd.f32 %v195, %v75
    %v204 = vadd.f32 %v196, %v75
    %v205 = vadd.f32 %v197, %v75
    %v206 = vadd.f32 %v198, %v75
    %v207 = vmax.f32 %v199, 0.0
    %v208 = vmax.f32 %v200, 0.0
    %v209 = vmax.f32 %v201, 0.0
    %v210 = vmax.f32 %v202, 0.0
    %v211 = vmax.f32 %v203, 0.0
    %v212 = vmax.f32 %v204, 0.0
    %v213 = vmax.f32 %v205, 0.0
    %v214 = vmax.f32 %v206, 0.0
    %vm215 = vcmask 130048
    %v217 = vsel %vm215, %v40, 0
    %v220 = vsel %vm215, %v41, 0
    %222 = vmatprep.subr.mxu0 0.0
    %223 = vmatpush1.msra.mxu0 0.0
    %224 = vmatprep.subr.mxu0 0.0
    %225 = vmatpush1.msra.mxu0 0.0
    %226 = vmatprep.subr.mxu0 0.0
    %227 = vmatpush1.msra.mxu0 0.0
    %228 = vmatprep.subr.mxu0 0.0
    %229 = vmatpush1.msra.mxu0 0.0
    %230 = vmatprep.subr.mxu0 0.0
    %231 = vmatpush1.msra.mxu0 0.0
    %232 = vmatprep.subr.mxu0 0.0
    %233 = vmatpush1.msra.mxu0 0.0
    %234 = vmatprep.subr.mxu0 0.0
    %235 = vmatpush1.msra.mxu0 0.0
    %236 = vmatprep.subr.mxu0 0.0
    %237 = vmatpush1.msra.mxu0 0.0
    %238 = vmatprep.subr.mxu0 0.0
    %239 = vmatpush1.msra.mxu0 0.0
    %240 = vmatprep.subr.mxu0 0.0
    %241 = vmatpush1.msra.mxu0 0.0
    %242 = vmatprep.subr.mxu0 0.0
    %243 = vmatpush1.msra.mxu0 0.0
    %244 = vmatprep.subr.mxu0 0.0
    %245 = vmatpush1.msra.mxu0 0.0
    %246 = vmatprep.subr.mxu0 0.0
    %247 = vmatpush1.msra.mxu0 0.0
    %248 = vmatprep.subr.mxu0 0.0
    %249 = vmatpush1.msra.mxu0 0.0
    %250 = vmatprep.subr.mxu0 %v212
    %251 = vmatpush1.msra.mxu0 %v211
    %252 = vmatprep.subr.mxu0 %v208
    %253 = vmatpush1.msra.mxu0 %v207
    %254 = vmatprep.subr.mxu0 0.0
    %255 = vmatpush2.msra.mxu0 0.0
    %256 = vmatprep.subr.mxu0 0.0
    %257 = vmatpush2.msra.mxu0 0.0
    %258 = vmatprep.subr.mxu0 0.0
    %259 = vmatpush2.msra.mxu0 0.0
    %260 = vmatprep.subr.mxu0 0.0
    %261 = vmatpush2.msra.mxu0 0.0
    %262 = vmatprep.subr.mxu0 0.0
    %263 = vmatpush2.msra.mxu0 0.0
    %264 = vmatprep.subr.mxu0 0.0
    %265 = vmatpush2.msra.mxu0 0.0
    %266 = vmatprep.subr.mxu0 0.0
    %267 = vmatpush2.msra.mxu0 0.0
    %268 = vmatprep.subr.mxu0 0.0
    %269 = vmatpush2.msra.mxu0 0.0
    %270 = vmatprep.subr.mxu0 0.0
    %271 = vmatpush2.msra.mxu0 0.0
    %272 = vmatprep.subr.mxu0 0.0
    %273 = vmatpush2.msra.mxu0 0.0
    %274 = vmatprep.subr.mxu0 0.0
    %275 = vmatpush2.msra.mxu0 0.0
    %276 = vmatprep.subr.mxu0 0.0
    %277 = vmatpush2.msra.mxu0 0.0
    %278 = vmatprep.subr.mxu0 0.0
    %279 = vmatpush2.msra.mxu0 0.0
    %280 = vmatprep.subr.mxu0 0.0
    %281 = vmatpush2.msra.mxu0 0.0
    %282 = vmatprep.subr.mxu0 0.0
    %283 = vmatpush2.msra.mxu0 0.0
    %284 = vmatprep.subr.mxu0 0.0
    %285 = vmatpush2.msra.mxu0 0.0
    %286 = vmatprep.mubr.f32.mxu0 0.0
    %287 = vmatmul.mubr.f32.gmra.mxu0 %v217
    %v288 = vpop.f32.mrf.mxu0
    %v289 = vadd.f32 %v82, %v288
    %v290 = vpop.f32.mrf.mxu0
    %v291 = vadd.f32 %v82, %v290
    %292 = vmatprep.mubr.f32.mxu0 0.0
    %293 = vmatmul.mubr.f32.gmra.mxu0 %v220
    %v294 = vpop.f32.mrf.mxu0
    %v295 = vadd.f32 %v87, %v294
    %v296 = vpop.f32.mrf.mxu0
    %v297 = vadd.f32 %v87, %v296
    %298 = vdwg.mxu0
    %299 = vmatprep.subr.mxu0 0.0
    %300 = vmatpush1.msra.mxu0 0.0
    %301 = vmatprep.subr.mxu0 0.0
    %302 = vmatpush1.msra.mxu0 0.0
    %303 = vmatprep.subr.mxu0 0.0
    %304 = vmatpush1.msra.mxu0 0.0
    %305 = vmatprep.subr.mxu0 0.0
    %306 = vmatpush1.msra.mxu0 0.0
    %307 = vmatprep.subr.mxu0 0.0
    %308 = vmatpush1.msra.mxu0 0.0
    %309 = vmatprep.subr.mxu0 0.0
    %310 = vmatpush1.msra.mxu0 0.0
    %311 = vmatprep.subr.mxu0 0.0
    %312 = vmatpush1.msra.mxu0 0.0
    %313 = vmatprep.subr.mxu0 0.0
    %314 = vmatpush1.msra.mxu0 0.0
    %315 = vmatprep.subr.mxu0 0.0
    %316 = vmatpush1.msra.mxu0 0.0
    %317 = vmatprep.subr.mxu0 0.0
    %318 = vmatpush1.msra.mxu0 0.0
    %319 = vmatprep.subr.mxu0 0.0
    %320 = vmatpush1.msra.mxu0 0.0
    %321 = vmatprep.subr.mxu0 0.0
    %322 = vmatpush1.msra.mxu0 0.0
    %323 = vmatprep.subr.mxu0 0.0
    %324 = vmatpush1.msra.mxu0 0.0
    %325 = vmatprep.subr.mxu0 0.0
    %326 = vmatpush1.msra.mxu0 0.0
    %327 = vmatprep.subr.mxu0 %v214
    %328 = vmatpush1.msra.mxu0 %v213
    %329 = vmatprep.subr.mxu0 %v210
    %330 = vmatpush1.msra.mxu0 %v209
    %331 = vmatprep.subr.mxu0 0.0
    %332 = vmatpush2.msra.mxu0 0.0
    %333 = vmatprep.subr.mxu0 0.0
    %334 = vmatpush2.msra.mxu0 0.0
    %335 = vmatprep.subr.mxu0 0.0
    %336 = vmatpush2.msra.mxu0 0.0
    %337 = vmatprep.subr.mxu0 0.0
    %338 = vmatpush2.msra.mxu0 0.0
    %339 = vmatprep.subr.mxu0 0.0
    %340 = vmatpush2.msra.mxu0 0.0
    %341 = vmatprep.subr.mxu0 0.0
    %342 = vmatpush2.msra.mxu0 0.0
    %343 = vmatprep.subr.mxu0 0.0
    %344 = vmatpush2.msra.mxu0 0.0
    %345 = vmatprep.subr.mxu0 0.0
    %346 = vmatpush2.msra.mxu0 0.0
    %347 = vmatprep.subr.mxu0 0.0
    %348 = vmatpush2.msra.mxu0 0.0
    %349 = vmatprep.subr.mxu0 0.0
    %350 = vmatpush2.msra.mxu0 0.0
    %351 = vmatprep.subr.mxu0 0.0
    %352 = vmatpush2.msra.mxu0 0.0
    %353 = vmatprep.subr.mxu0 0.0
    %354 = vmatpush2.msra.mxu0 0.0
    %355 = vmatprep.subr.mxu0 0.0
    %356 = vmatpush2.msra.mxu0 0.0
    %357 = vmatprep.subr.mxu0 0.0
    %358 = vmatpush2.msra.mxu0 0.0
    %359 = vmatprep.subr.mxu0 0.0
    %360 = vmatpush2.msra.mxu0 0.0
    %361 = vmatprep.subr.mxu0 0.0
    %362 = vmatpush2.msra.mxu0 0.0
    %363 = vmatprep.mubr.f32.mxu0 0.0
    %364 = vmatmul.mubr.f32.gmra.mxu0 %v217
    %v365 = vpop.f32.mrf.mxu0
    %v366 = vadd.f32 %v82, %v365
    %v367 = vpop.f32.mrf.mxu0
    %v368 = vadd.f32 %v82, %v367
    %369 = vmatprep.mubr.f32.mxu0 0.0
    %370 = vmatmul.mubr.f32.gmra.mxu0 %v220
    %v371 = vpop.f32.mrf.mxu0
    %v372 = vadd.f32 %v87, %v371
    %v373 = vpop.f32.mrf.mxu0
    %v374 = vadd.f32 %v87, %v373
    %375 = vdwg.mxu0
    %v376 = vmax.f32 %v289, 0.0
    %v377 = vmax.f32 %v291, 0.0
    %v378 = vmax.f32 %v366, 0.0
    %v379 = vmax.f32 %v368, 0.0
    %v380 = vmax.f32 %v295, 0.0
    %v381 = vmax.f32 %v297, 0.0
    %v382 = vmax.f32 %v372, 0.0
    %v383 = vmax.f32 %v374, 0.0
    %v384 = vmul.f32 %v94, %v376
    %v385 = vmul.f32 %v94, %v377
    %v386 = vmul.f32 %v94, %v378
    %v387 = vmul.f32 %v94, %v379
    %v388 = vmul.f32 %v99, %v380
    %v389 = vmul.f32 %v99, %v381
    %v390 = vmul.f32 %v99, %v382
    %v391 = vmul.f32 %v99, %v383
    %v392 = vadd.f32 %v384, %v388
    %v393 = vrot.slane %v392, 4
    %v394 = vadd.f32 %v392, %v393
    %v395 = vrot.slane %v394, 2
    %v396 = vadd.f32 %v394, %v395
    %v397 = vrot.slane %v396, 1
    %v398 = vadd.f32 %v396, %v397
    %v399 = vadd.f32 %v385, %v389
    %v400 = vrot.slane %v399, 4
    %v401 = vadd.f32 %v399, %v400
    %v402 = vrot.slane %v401, 2
    %v403 = vadd.f32 %v401, %v402
    %v404 = vrot.slane %v403, 1
    %v405 = vadd.f32 %v403, %v404
    %v406 = vadd.f32 %v386, %v390
    %v407 = vrot.slane %v406, 4
    %v408 = vadd.f32 %v406, %v407
    %v409 = vrot.slane %v408, 2
    %v410 = vadd.f32 %v408, %v409
    %v411 = vrot.slane %v410, 1
    %v412 = vadd.f32 %v410, %v411
    %v413 = vadd.f32 %v387, %v391
    %v414 = vrot.slane %v413, 4
    %v415 = vadd.f32 %v413, %v414
    %v416 = vrot.slane %v415, 2
    %v417 = vadd.f32 %v415, %v416
    %v418 = vrot.slane %v417, 1
    %v419 = vadd.f32 %v417, %v418
    %v420 = vstv %s44
    %v421 = vadd.f32 %v398, %v420
    %v422 = vadd.f32 %v405, %v420
    %v423 = vadd.f32 %v412, %v420
    %v424 = vadd.f32 %v419, %v420
    %v425 = vstv %s42
    %v426 = vmax.f32 %v425, %v421
    %v427 = vmax.f32 %v425, %v422
    %v428 = vmax.f32 %v425, %v423
    %v429 = vmax.f32 %v425, %v424
    %v430 = vstv %s43
    %v431 = vmin.f32 %v430, %v426
    %v432 = vmin.f32 %v430, %v427
    %v433 = vmin.f32 %v430, %v428
    %v434 = vmin.f32 %v430, %v429
    %v439 = vcombine.low %v431, %v432
    %v440 = vcombine.low %v433, %v434
    %v442 = vunpack.c.l.s4 1966171168
    %v443 = vunpack.c.0.s8 %v442
    %v444 = vlaneseq
    %v445 = vshrl.u32 %v444, 7
    %v446 = vsub.s32 %v443, %v445
    %v447 = vrot.slane %v439, %v446
    %v449 = vunpack.c.l.s4 1966171168
    %v450 = vunpack.c.0.s8 %v449
    %v451 = vlaneseq
    %v452 = vshrl.u32 %v451, 7
    %v453 = vsub.s32 %v450, %v452
    %v454 = vrot.slane %v440, %v453
    %v455 = vcombine.low %v447, %v454
    %v457 = vunpack.c.l.s4 1966171168
    %v458 = vunpack.c.0.s8 %v457
    %v459 = vlaneseq
    %v460 = vshrl.u32 %v459, 7
    %v461 = vsub.s32 %v458, %v460
    %v462 = vrot.slane %v455, %v461
    %v464 = vlaneseq
    %vm465 = vcmp.ge.s32.totalorder %v464, 0
    %vm466 = vcmp.lt.s32.totalorder %v464, 512
    %vm467 = vmand %vm465, %vm466
    %468 = vst.msk [vmem:[#allocation5] sm:$0xf] %vm467, %v462
    // Predicated region
    $region34: #{tpu_custom_call.1} parent=1 // pred_check
      _
    $region35: #{tpu_custom_call.1} parent=1 // pred_check_branch
      %470 = sbr.rel (0) target = $region37
    $region36: #{tpu_custom_call.1} parent=1 // pred_region
      %s472 = ssub.s32 64, 64
      %473 = vsyncadd [#allocation3], %s472
      %s475 = sshll.u32 [#allocation5], 4
      %s476 = int_to_ptr.vmem [resolvable:$true] %s475
      %478 = dma.vmem_to_hbm [thread:$0]  %s476, 64, %s7, [#allocation3]
    $region37: #{tpu_custom_call.1} parent=1 // pred_fallthru
      _
    // Predicated region
    $region38: #{tpu_custom_call.1} parent=1 // pred_check
      _
    $region39: #{tpu_custom_call.1} parent=1 // pred_check_branch
      %480 = sbr.rel (0) target = $region41
    $region40: #{tpu_custom_call.1} parent=1 // pred_region
      %481 = dma.done [#allocation3], 64
    $region41: #{tpu_custom_call.1} parent=1 // pred_fallthru
      _
    %482 = vsyncpa [#allocation3], 1
    %483 = vsyncpa [#allocation4], 1

</llo_original>
